<compile_context>
chip_gen: v5e
topology: v5e:2x2
jax: 0.10.0
libtpu: 0.0.40
codegen_flags: <defaults>
</compile_context>

<pallas_src>
import jax
import jax.numpy as jnp
from jax.experimental import pallas as pl
from jax.experimental.pallas import tpu as pltpu

HIDDEN = 128          # hidden_layer (lane-aligned stand-in for 1024)
NUM_SOURCE = 6        # number of source domains (output classes)
NS_PAD = 128          # class dim padded to a full lane width for dense stores
TB = 256              # batch tile: fills the 256-wide MXU rows on v6e/v7x
BATCH = 256           # example batch -> single grid step at TB=256


def discriminator_kernel(x_ref, w1_ref, b1_ref, w2_ref, b2_ref, w3_ref, b3_ref, o_ref):
    # x streams in its native dtype; bf16 cast is a VPU op hidden under the MXU.
    x = x_ref[...].astype(jnp.bfloat16)                      # (TB, H)

    # fc1: bf16 MXU operands, f32 accumulation; bias add in f32, then cast + ReLU on
    # the bf16 value (identical result to relu-then-cast, half the live temp width).
    h = jnp.dot(x, w1_ref[...], preferred_element_type=jnp.float32) + b1_ref[...]
    h = jnp.maximum(h.astype(jnp.bfloat16), 0.0)

    # fc2
    h = jnp.dot(h, w2_ref[...], preferred_element_type=jnp.float32) + b2_ref[...]
    h = jnp.maximum(h.astype(jnp.bfloat16), 0.0)

    # fc3: padded class columns carry b3 = -1e30 (zero weights), so they vanish below.
    logits = jnp.dot(h, w3_ref[...], preferred_element_type=jnp.float32) + b3_ref[...]

    # LogSoftmax over the class (lane) axis. No mask needed: exp() of the padded
    # -1e30 columns underflows to 0 in f32, so they never contribute to the sum.
    m = jnp.max(logits, axis=1, keepdims=True)
    z = logits - m
    lse = jnp.log(jnp.sum(jnp.exp(z), axis=1, keepdims=True))
    o_ref[...] = z - lse    # padded columns hold garbage; sliced off in the wrapper


def discriminator_forward(x, params, tb=TB):
    w1, b1, w2, b2, w3, b3 = params
    B, H = x.shape

    # Pad the batch to a multiple of the tile (padded rows are harmless and dropped).
    Bp = pl.cdiv(B, tb) * tb
    if Bp != B:
        x = jnp.pad(x, ((0, Bp - B), (0, 0)))
    n_tiles = Bp // tb

    # Weights/biases are VMEM-resident (constant index_map -> one DMA per call).
    # For the real hidden_layer=1024 working set, single-buffer them: double-buffering
    # a block that never changes buys nothing and doubles resident VMEM.
    weight_pipeline = pl.Buffered(1) if H >= 512 else None

    def resident(shape):
        kwargs = {} if weight_pipeline is None else {"pipeline_mode": weight_pipeline}
        return pl.BlockSpec(shape, lambda i: tuple(0 for _ in shape), **kwargs)

    # Explicit VMEM budget: resident weights (+biases), double-buffered x/out tiles,
    # f32 activation temporaries, with 2x headroom. Clamped to a portable range.
    w_itemsize = jnp.dtype(w1.dtype).itemsize
    w_bytes = (2 * H * H + H * NS_PAD) * w_itemsize + (2 * H + NS_PAD) * 4
    w_bufs = 1 if weight_pipeline is not None else 2
    x_tile_bytes = 2 * tb * H * x.dtype.itemsize     # double-buffered input tile
    out_tile_bytes = 2 * tb * NS_PAD * 4             # double-buffered f32 output tile
    act_bytes = 2 * tb * H * 4                       # in-kernel f32/bf16 temporaries
    vmem_limit = int(min(max(2 * (w_bufs * w_bytes + x_tile_bytes + out_tile_bytes
                                  + act_bytes), 16 << 20), 64 << 20))

    # Megacore sharding duplicates the weight DMA per core: only worth it when the
    # streamed activation bytes dominate the resident weight bytes.
    use_parallel = (n_tiles >= 2) and (Bp * H * x.dtype.itemsize >= 4 * w_bytes)
    semantics = ("parallel",) if use_parallel else ("arbitrary",)

    out = pl.pallas_call(
        discriminator_kernel,
        out_shape=jax.ShapeDtypeStruct((Bp, NS_PAD), jnp.float32),
        grid=(n_tiles,),
        in_specs=[
            pl.BlockSpec((tb, H), lambda i: (i, 0)),       # x: tiled along batch
            resident((H, H)), resident((1, H)),            # w1, b1 (VMEM-resident)
            resident((H, H)), resident((1, H)),            # w2, b2
            resident((H, NS_PAD)), resident((1, NS_PAD)),  # w3, b3
        ],
        out_specs=pl.BlockSpec((tb, NS_PAD), lambda i: (i, 0)),
        compiler_params=pltpu.CompilerParams(
            dimension_semantics=semantics,
            vmem_limit_bytes=vmem_limit),
    )(x, w1, b1, w2, b2, w3, b3)

    return out[:B, :NUM_SOURCE]


def init_params(key, hidden=HIDDEN, num_source=NUM_SOURCE):
    ks = jax.random.split(key, 6)
    # deterministic, PyTorch-Linear-like uniform init
    bound = 1.0 / jnp.sqrt(hidden)
    w1 = jax.random.uniform(ks[0], (hidden, hidden), jnp.float32, -bound, bound)
    b1 = jax.random.uniform(ks[1], (1, hidden), jnp.float32, -bound, bound)
    w2 = jax.random.uniform(ks[2], (hidden, hidden), jnp.float32, -bound, bound)
    b2 = jax.random.uniform(ks[3], (1, hidden), jnp.float32, -bound, bound)
    w3_real = jax.random.uniform(ks[4], (hidden, num_source), jnp.float32, -bound, bound)
    b3_real = jax.random.uniform(ks[5], (1, num_source), jnp.float32, -bound, bound)

    # Pad class dim to NS_PAD lanes. Padded w3 columns are 0; padded b3 columns are
    # -1e30 so the in-kernel log-softmax needs no explicit mask.
    w3 = jnp.zeros((hidden, NS_PAD), jnp.float32).at[:, :num_source].set(w3_real)
    b3 = jnp.full((1, NS_PAD), -1e30, jnp.float32).at[:, :num_source].set(b3_real)

    # Weights in bf16 (halves the weight stream, native MXU path); biases in f32.
    return (w1.astype(jnp.bfloat16), b1,
            w2.astype(jnp.bfloat16), b2,
            w3.astype(jnp.bfloat16), b3)


def reference_forward(x, params):
    # Pure-JAX reference mirroring the kernel's bf16-operand / f32-accumulate math.
    w1, b1, w2, b2, w3, b3 = params
    xb = x.astype(jnp.bfloat16)
    h = jnp.dot(xb, w1, preferred_element_type=jnp.float32) + b1
    h = jnp.maximum(h.astype(jnp.bfloat16), 0.0)
    h = jnp.dot(h, w2, preferred_element_type=jnp.float32) + b2
    h = jnp.maximum(h.astype(jnp.bfloat16), 0.0)
    logits = (jnp.dot(h, w3, preferred_element_type=jnp.float32) + b3)[:, :NUM_SOURCE]
    return jax.nn.log_softmax(logits, axis=1)


if __name__ == "__main__":
    key = jax.random.PRNGKey(0)
    k_x, k_p = jax.random.split(key)
    x = jax.random.normal(k_x, (BATCH, HIDDEN), jnp.float32)
    params = init_params(k_p)

    out = discriminator_forward(x, params)
    out = jax.block_until_ready(out)

    ref = reference_forward(x, params)
    assert out.shape == (BATCH, NUM_SOURCE)
    assert jnp.allclose(out, ref, atol=1e-4, rtol=1e-4), "mismatch vs reference"

    print("KERNEL_OK")
</pallas_src>

<mosaic_0001>
module attributes {stable_mosaic.version = 11 : i64} {
  func.func @discriminator_kernel(%arg0: i32, %arg1: memref<256x128xf32, #tpu.memory_space<vmem>>, %arg2: memref<128x128xbf16, #tpu.memory_space<vmem>>, %arg3: memref<1x128xf32, #tpu.memory_space<vmem>>, %arg4: memref<128x128xbf16, #tpu.memory_space<vmem>>, %arg5: memref<1x128xf32, #tpu.memory_space<vmem>>, %arg6: memref<128x128xbf16, #tpu.memory_space<vmem>>, %arg7: memref<1x128xf32, #tpu.memory_space<vmem>>, %arg8: memref<256x128xf32, #tpu.memory_space<vmem>>) attributes {dimension_semantics = [#tpu.dimension_semantics<arbitrary>], iteration_bounds = array<i64: 1>, scalar_prefetch = 0 : i64, scratch_operands = 0 : i64, tpu.core_type = #tpu.core_type<tc>, window_params = [{transform_indices = @transform_0, window_bounds = array<i64: 256, 128>}, {pipeline_mode = #tpu.pipeline_mode<synchronous>, transform_indices = @transform_1, window_bounds = array<i64: 128, 128>}, {pipeline_mode = #tpu.pipeline_mode<synchronous>, transform_indices = @transform_2, window_bounds = array<i64: 1, 128>}, {pipeline_mode = #tpu.pipeline_mode<synchronous>, transform_indices = @transform_3, window_bounds = array<i64: 128, 128>}, {pipeline_mode = #tpu.pipeline_mode<synchronous>, transform_indices = @transform_4, window_bounds = array<i64: 1, 128>}, {pipeline_mode = #tpu.pipeline_mode<synchronous>, transform_indices = @transform_5, window_bounds = array<i64: 128, 128>}, {pipeline_mode = #tpu.pipeline_mode<synchronous>, transform_indices = @transform_6, window_bounds = array<i64: 1, 128>}, {transform_indices = @transform_7, window_bounds = array<i64: 256, 128>}]} {
    %c0 = arith.constant 0 : index
    %c0_0 = arith.constant 0 : index
    %0 = vector.load %arg1[%c0, %c0_0] : memref<256x128xf32, #tpu.memory_space<vmem>>, vector<256x128xf32>
    %1 = arith.truncf %0 : vector<256x128xf32> to vector<256x128xbf16>
    %c0_1 = arith.constant 0 : index
    %c0_2 = arith.constant 0 : index
    %2 = vector.load %arg2[%c0_1, %c0_2] : memref<128x128xbf16, #tpu.memory_space<vmem>>, vector<128x128xbf16>
    %cst = arith.constant dense<0.000000e+00> : vector<256x128xf32>
    %3 = tpu.matmul %1, %2, %cst {dimension_numbers = #tpu.dot_dimension_numbers<[1], [0], [0], [1], [0, 0, 1, 1], [], []>} : vector<256x128xbf16>, vector<128x128xbf16>, vector<256x128xf32> -> vector<256x128xf32>
    %c0_3 = arith.constant 0 : index
    %c0_4 = arith.constant 0 : index
    %4 = vector.load %arg3[%c0_3, %c0_4] : memref<1x128xf32, #tpu.memory_space<vmem>>, vector<1x128xf32>
    %5 = vector.broadcast %4 : vector<1x128xf32> to vector<256x128xf32>
    %6 = arith.addf %3, %5 : vector<256x128xf32>
    %7 = arith.truncf %6 : vector<256x128xf32> to vector<256x128xbf16>
    %cst_5 = arith.constant 0.000000e+00 : bf16
    %8 = vector.broadcast %cst_5 : bf16 to vector<256x128xbf16>
    %9 = arith.maximumf %7, %8 : vector<256x128xbf16>
    %c0_6 = arith.constant 0 : index
    %c0_7 = arith.constant 0 : index
    %10 = vector.load %arg4[%c0_6, %c0_7] : memref<128x128xbf16, #tpu.memory_space<vmem>>, vector<128x128xbf16>
    %cst_8 = arith.constant dense<0.000000e+00> : vector<256x128xf32>
    %11 = tpu.matmul %9, %10, %cst_8 {dimension_numbers = #tpu.dot_dimension_numbers<[1], [0], [0], [1], [0, 0, 1, 1], [], []>} : vector<256x128xbf16>, vector<128x128xbf16>, vector<256x128xf32> -> vector<256x128xf32>
    %c0_9 = arith.constant 0 : index
    %c0_10 = arith.constant 0 : index
    %12 = vector.load %arg5[%c0_9, %c0_10] : memref<1x128xf32, #tpu.memory_space<vmem>>, vector<1x128xf32>
    %13 = vector.broadcast %12 : vector<1x128xf32> to vector<256x128xf32>
    %14 = arith.addf %11, %13 : vector<256x128xf32>
    %15 = arith.truncf %14 : vector<256x128xf32> to vector<256x128xbf16>
    %cst_11 = arith.constant 0.000000e+00 : bf16
    %16 = vector.broadcast %cst_11 : bf16 to vector<256x128xbf16>
    %17 = arith.maximumf %15, %16 : vector<256x128xbf16>
    %c0_12 = arith.constant 0 : index
    %c0_13 = arith.constant 0 : index
    %18 = vector.load %arg6[%c0_12, %c0_13] : memref<128x128xbf16, #tpu.memory_space<vmem>>, vector<128x128xbf16>
    %cst_14 = arith.constant dense<0.000000e+00> : vector<256x128xf32>
    %19 = tpu.matmul %17, %18, %cst_14 {dimension_numbers = #tpu.dot_dimension_numbers<[1], [0], [0], [1], [0, 0, 1, 1], [], []>} : vector<256x128xbf16>, vector<128x128xbf16>, vector<256x128xf32> -> vector<256x128xf32>
    %c0_15 = arith.constant 0 : index
    %c0_16 = arith.constant 0 : index
    %20 = vector.load %arg7[%c0_15, %c0_16] : memref<1x128xf32, #tpu.memory_space<vmem>>, vector<1x128xf32>
    %21 = vector.broadcast %20 : vector<1x128xf32> to vector<256x128xf32>
    %22 = arith.addf %19, %21 : vector<256x128xf32>
    %cst_17 = arith.constant dense<0xFF800000> : vector<256xf32>
    %23 = vector.multi_reduction <maximumf>, %22, %cst_17 [1] : vector<256x128xf32> to vector<256xf32>
    %24 = vector.shape_cast %23 : vector<256xf32> to vector<256x1xf32>
    %25 = vector.broadcast %24 : vector<256x1xf32> to vector<256x128xf32>
    %26 = arith.subf %22, %25 : vector<256x128xf32>
    %27 = math.exp %26 : vector<256x128xf32>
    %cst_18 = arith.constant dense<0.000000e+00> : vector<256xf32>
    %28 = vector.multi_reduction <add>, %27, %cst_18 [1] : vector<256x128xf32> to vector<256xf32>
    %29 = vector.shape_cast %28 : vector<256xf32> to vector<256x1xf32>
    %30 = math.log %29 : vector<256x1xf32>
    %31 = vector.broadcast %30 : vector<256x1xf32> to vector<256x128xf32>
    %32 = arith.subf %26, %31 : vector<256x128xf32>
    %c0_19 = arith.constant 0 : index
    %c0_20 = arith.constant 0 : index
    %33 = vector.load %arg8[%c0_19, %c0_20] : memref<256x128xf32, #tpu.memory_space<vmem>>, vector<256x128xf32>
    tpu.vector_store %arg8[%c0_19, %c0_20], %32 {strides = array<i32>} : memref<256x128xf32, #tpu.memory_space<vmem>>, vector<256x128xf32>,
    return
  }
  func.func @transform_0(%arg0: i32) -> (i32, i32) {
    %c0_i32 = arith.constant 0 : i32
    %c0_i32_0 = arith.constant 0 : i32
    return %arg0, %c0_i32 : i32, i32
  }
  func.func @transform_1(%arg0: i32) -> (i32, i32) {
    %c0_i32 = arith.constant 0 : i32
    %c0_i32_0 = arith.constant 0 : i32
    %c0_i32_1 = arith.constant 0 : i32
    return %c0_i32, %c0_i32_0 : i32, i32
  }
  func.func @transform_2(%arg0: i32) -> (i32, i32) {
    %c0_i32 = arith.constant 0 : i32
    %c0_i32_0 = arith.constant 0 : i32
    %c0_i32_1 = arith.constant 0 : i32
    return %c0_i32, %c0_i32_0 : i32, i32
  }
  func.func @transform_3(%arg0: i32) -> (i32, i32) {
    %c0_i32 = arith.constant 0 : i32
    %c0_i32_0 = arith.constant 0 : i32
    %c0_i32_1 = arith.constant 0 : i32
    return %c0_i32, %c0_i32_0 : i32, i32
  }
  func.func @transform_4(%arg0: i32) -> (i32, i32) {
    %c0_i32 = arith.constant 0 : i32
    %c0_i32_0 = arith.constant 0 : i32
    %c0_i32_1 = arith.constant 0 : i32
    return %c0_i32, %c0_i32_0 : i32, i32
  }
  func.func @transform_5(%arg0: i32) -> (i32, i32) {
    %c0_i32 = arith.constant 0 : i32
    %c0_i32_0 = arith.constant 0 : i32
    %c0_i32_1 = arith.constant 0 : i32
    return %c0_i32, %c0_i32_0 : i32, i32
  }
  func.func @transform_6(%arg0: i32) -> (i32, i32) {
    %c0_i32 = arith.constant 0 : i32
    %c0_i32_0 = arith.constant 0 : i32
    %c0_i32_1 = arith.constant 0 : i32
    return %c0_i32, %c0_i32_0 : i32, i32
  }
  func.func @transform_7(%arg0: i32) -> (i32, i32) {
    %c0_i32 = arith.constant 0 : i32
    %c0_i32_0 = arith.constant 0 : i32
    return %arg0, %c0_i32 : i32, i32
  }
}

</mosaic_0001>

<llo_original>
// kernel: tpu_custom_call.1
$region0: #{tpu_custom_call.1}
  #allocation0 [shape = 'u32[]', space=smem, size = 0x4, offset = 0x4, fixed_abs, tag = 'smem constant byte address 0x4 - core index']
  #allocation1 [shape = 'u32[72,128]{1,0:T(1,128)}', space=vmem, size = 0x9000, scoped, tag = 'internal scratch']
  %s0 = inlined_call_operand.hbm [shape: f32[256,128], index: 0, kind: input, shape index: {}]
  %s1 = inlined_call_operand.hbm [shape: bf16[128,128], index: 1, kind: input, shape index: {}]
  %s2 = inlined_call_operand.vmem [shape: f32[1,128], index: 2, kind: input, shape index: {}]
  %s3 = inlined_call_operand.hbm [shape: bf16[128,128], index: 3, kind: input, shape index: {}]
  %s4 = inlined_call_operand.vmem [shape: f32[1,128], index: 4, kind: input, shape index: {}]
  %s5 = inlined_call_operand.hbm [shape: bf16[128,128], index: 5, kind: input, shape index: {}]
  %s6 = inlined_call_operand.vmem [shape: f32[1,128], index: 6, kind: input, shape index: {}]
  %s7 = inlined_call_operand.hbm [shape: f32[256,128], index: 7, kind: output, shape index: {}]
  %s8 = sld [smem:[#allocation0]]
  $region54: #{tpu_custom_call.1} parent=0
    _
  %s10 = ssub.s32 1, %s8
  %s11 = scalar_select 0, %s10, %s8
  $region1: #{tpu_custom_call.1} parent=0
    #allocation2 [shape = 'u8[131072]{0}', space=vmem, size = 0x20000, scoped, tag = 'input window, operand 0, single buffered']
    #allocation3 [shape = 's32[1]{0}', space=sflag, size = 0x4, scoped, tag = 'scoped memory for tpu_custom_call.1']
    #allocation4 [shape = 's32[1]{0}', space=sflag, size = 0x4, scoped, tag = 'scoped memory for tpu_custom_call.1']
    #allocation5 [shape = 'u8[32768]{0}', space=vmem, size = 0x8000, scoped, tag = 'input window, operand 1, single buffered']
    #allocation6 [shape = 's32[1]{0}', space=sflag, size = 0x4, scoped, tag = 'scoped memory for tpu_custom_call.1']
    #allocation7 [shape = 'u8[32768]{0}', space=vmem, size = 0x8000, scoped, tag = 'input window, operand 3, single buffered']
    #allocation8 [shape = 'u8[32768]{0}', space=vmem, size = 0x8000, scoped, tag = 'input window, operand 5, single buffered']
    #allocation9 [shape = 's32[1]{0}', space=sflag, size = 0x4, scoped, tag = 'scoped memory for tpu_custom_call.1']
    #allocation10 [shape = 'u8[131072]{0}', space=vmem, size = 0x20000, scoped, tag = 'output window, operand 0, single buffered']
    %12 = vsyncpa [#allocation3], 0
    %13 = vsyncpa [#allocation6], 0
    %14 = vsyncpa [#allocation9], 0
    %15 = vsyncpa [#allocation4], 0
    // Predicated region
    $region2: #{tpu_custom_call.1} parent=1 // pred_check
      _
    $region3: #{tpu_custom_call.1} parent=1 // pred_check_branch
      %17 = sbr.rel (0) target = $region5
    $region4: #{tpu_custom_call.1} parent=1 // pred_region
      %19 = vsyncadd [#allocation3], 0
      %s20 = sshll.u32 %s0, 4
      %s21 = int_to_ptr.hbm [resolvable:$true] %s20
      %s22 = sshll.u32 [#allocation2], 4
      %s23 = int_to_ptr.vmem [resolvable:$true] %s22
      %28 = dma.hbm_to_vmem [thread:$0]  %s21, 4096, %s23, [#allocation3], 128, 128, 8
    $region5: #{tpu_custom_call.1} parent=1 // pred_fallthru
      _
    // Predicated region
    $region6: #{tpu_custom_call.1} parent=1 // pred_check
      _
    $region7: #{tpu_custom_call.1} parent=1 // pred_check_branch
      %30 = sbr.rel (0) target = $region9
    $region8: #{tpu_custom_call.1} parent=1 // pred_region
      %32 = vsyncadd [#allocation6], 0
      %s33 = sshll.u32 %s1, 4
      %s34 = int_to_ptr.hbm [resolvable:$true] %s33
      %s35 = sshll.u32 [#allocation5], 4
      %s36 = int_to_ptr.vmem [resolvable:$true] %s35
      %41 = dma.hbm_to_vmem [thread:$0]  %s34, 1024, %s36, [#allocation6], 64, 64, 4
    $region9: #{tpu_custom_call.1} parent=1 // pred_fallthru
      _
    // Predicated region
    $region10: #{tpu_custom_call.1} parent=1 // pred_check
      _
    $region11: #{tpu_custom_call.1} parent=1 // pred_check_branch
      %43 = sbr.rel (0) target = $region13
    $region12: #{tpu_custom_call.1} parent=1 // pred_region
      _
    $region13: #{tpu_custom_call.1} parent=1 // pred_fallthru
      _
    // Predicated region
    $region14: #{tpu_custom_call.1} parent=1 // pred_check
      _
    $region15: #{tpu_custom_call.1} parent=1 // pred_check_branch
      %45 = sbr.rel (0) target = $region17
    $region16: #{tpu_custom_call.1} parent=1 // pred_region
      %47 = vsyncadd [#allocation6], 0
      %s48 = sshll.u32 %s3, 4
      %s49 = int_to_ptr.hbm [resolvable:$true] %s48
      %s50 = sshll.u32 [#allocation7], 4
      %s51 = int_to_ptr.vmem [resolvable:$true] %s50
      %56 = dma.hbm_to_vmem [thread:$0]  %s49, 1024, %s51, [#allocation6], 64, 64, 4
    $region17: #{tpu_custom_call.1} parent=1 // pred_fallthru
      _
    // Predicated region
    $region18: #{tpu_custom_call.1} parent=1 // pred_check
      _
    $region19: #{tpu_custom_call.1} parent=1 // pred_check_branch
      %58 = sbr.rel (0) target = $region21
    $region20: #{tpu_custom_call.1} parent=1 // pred_region
      _
    $region21: #{tpu_custom_call.1} parent=1 // pred_fallthru
      _
    // Predicated region
    $region22: #{tpu_custom_call.1} parent=1 // pred_check
      _
    $region23: #{tpu_custom_call.1} parent=1 // pred_check_branch
      %60 = sbr.rel (0) target = $region25
    $region24: #{tpu_custom_call.1} parent=1 // pred_region
      %62 = vsyncadd [#allocation9], 0
      %s63 = sshll.u32 %s5, 4
      %s64 = int_to_ptr.hbm [resolvable:$true] %s63
      %s65 = sshll.u32 [#allocation8], 4
      %s66 = int_to_ptr.vmem [resolvable:$true] %s65
      %71 = dma.hbm_to_vmem [thread:$0]  %s64, 1024, %s66, [#allocation9], 64, 64, 4
    $region25: #{tpu_custom_call.1} parent=1 // pred_fallthru
      _
    // Predicated region
    $region26: #{tpu_custom_call.1} parent=1 // pred_check
      _
    $region27: #{tpu_custom_call.1} parent=1 // pred_check_branch
      %73 = sbr.rel (0) target = $region29
    $region28: #{tpu_custom_call.1} parent=1 // pred_region
      _
    $region29: #{tpu_custom_call.1} parent=1 // pred_fallthru
      _
    // Predicated region
    $region30: #{tpu_custom_call.1} parent=1 // pred_check
      _
    $region31: #{tpu_custom_call.1} parent=1 // pred_check_branch
      %75 = sbr.rel (0) target = $region33
    $region32: #{tpu_custom_call.1} parent=1 // pred_region
      %77 = dma.done [#allocation3], 4096
    $region33: #{tpu_custom_call.1} parent=1 // pred_fallthru
      _
    // Predicated region
    $region34: #{tpu_custom_call.1} parent=1 // pred_check
      _
    $region35: #{tpu_custom_call.1} parent=1 // pred_check_branch
      %79 = sbr.rel (0) target = $region37
    $region36: #{tpu_custom_call.1} parent=1 // pred_region
      %81 = dma.done [#allocation6], 1024
    $region37: #{tpu_custom_call.1} parent=1 // pred_fallthru
      _
    // Predicated region
    $region38: #{tpu_custom_call.1} parent=1 // pred_check
      _
    $region39: #{tpu_custom_call.1} parent=1 // pred_check_branch
      %83 = sbr.rel (0) target = $region41
    $region40: #{tpu_custom_call.1} parent=1 // pred_region
      %85 = dma.done [#allocation6], 1024
    $region41: #{tpu_custom_call.1} parent=1 // pred_fallthru
      _
    // Predicated region
    $region42: #{tpu_custom_call.1} parent=1 // pred_check
      _
    $region43: #{tpu_custom_call.1} parent=1 // pred_check_branch
      %87 = sbr.rel (0) target = $region45
    $region44: #{tpu_custom_call.1} parent=1 // pred_region
      %89 = dma.done [#allocation9], 1024
    $region45: #{tpu_custom_call.1} parent=1 // pred_fallthru
      _
    %v90 = vld [vmem:[#allocation2] sm:$0xff]
    %v91 = vld [vmem:[#allocation2 + $0x8] sm:$0xff]
    %v92 = vld [vmem:[#allocation2 + $0x10] sm:$0xff]
    %v93 = vld [vmem:[#allocation2 + $0x18] sm:$0xff]
    %v94 = vld [vmem:[#allocation2 + $0x20] sm:$0xff]
    %v95 = vld [vmem:[#allocation2 + $0x28] sm:$0xff]
    %v96 = vld [vmem:[#allocation2 + $0x30] sm:$0xff]
    %v97 = vld [vmem:[#allocation2 + $0x38] sm:$0xff]
    %v98 = vld [vmem:[#allocation2 + $0x40] sm:$0xff]
    %v99 = vld [vmem:[#allocation2 + $0x48] sm:$0xff]
    %v100 = vld [vmem:[#allocation2 + $0x50] sm:$0xff]
    %v101 = vld [vmem:[#allocation2 + $0x58] sm:$0xff]
    %v102 = vld [vmem:[#allocation2 + $0x60] sm:$0xff]
    %v103 = vld [vmem:[#allocation2 + $0x68] sm:$0xff]
    %v104 = vld [vmem:[#allocation2 + $0x70] sm:$0xff]
    %v105 = vld [vmem:[#allocation2 + $0x78] sm:$0xff]
    %v106 = vld [vmem:[#allocation2 + $0x80] sm:$0xff]
    %v107 = vld [vmem:[#allocation2 + $0x88] sm:$0xff]
    %v108 = vld [vmem:[#allocation2 + $0x90] sm:$0xff]
    %v109 = vld [vmem:[#allocation2 + $0x98] sm:$0xff]
    %v110 = vld [vmem:[#allocation2 + $0xa0] sm:$0xff]
    %v111 = vld [vmem:[#allocation2 + $0xa8] sm:$0xff]
    %v112 = vld [vmem:[#allocation2 + $0xb0] sm:$0xff]
    %v113 = vld [vmem:[#allocation2 + $0xb8] sm:$0xff]
    %v114 = vld [vmem:[#allocation2 + $0xc0] sm:$0xff]
    %v115 = vld [vmem:[#allocation2 + $0xc8] sm:$0xff]
    %v116 = vld [vmem:[#allocation2 + $0xd0] sm:$0xff]
    %v117 = vld [vmem:[#allocation2 + $0xd8] sm:$0xff]
    %v118 = vld [vmem:[#allocation2 + $0xe0] sm:$0xff]
    %v119 = vld [vmem:[#allocation2 + $0xe8] sm:$0xff]
    %v120 = vld [vmem:[#allocation2 + $0xf0] sm:$0xff]
    %v121 = vld [vmem:[#allocation2 + $0xf8] sm:$0xff]
    %v122 = vpack.c.bf16 %v91, %v90
    %v123 = vpack.c.bf16 %v93, %v92
    %v124 = vpack.c.bf16 %v95, %v94
    %v125 = vpack.c.bf16 %v97, %v96
    %v126 = vpack.c.bf16 %v99, %v98
    %v127 = vpack.c.bf16 %v101, %v100
    %v128 = vpack.c.bf16 %v103, %v102
    %v129 = vpack.c.bf16 %v105, %v104
    %v130 = vpack.c.bf16 %v107, %v106
    %v131 = vpack.c.bf16 %v109, %v108
    %v132 = vpack.c.bf16 %v111, %v110
    %v133 = vpack.c.bf16 %v113, %v112
    %v134 = vpack.c.bf16 %v115, %v114
    %v135 = vpack.c.bf16 %v117, %v116
    %v136 = vpack.c.bf16 %v119, %v118
    %v137 = vpack.c.bf16 %v121, %v120
    %v138 = vld [vmem:[#allocation5] sm:$0xf]
    %v139 = vld [vmem:[#allocation5 + $0x4] sm:$0xf]
    %v140 = vld [vmem:[#allocation5 + $0x8] sm:$0xf]
    %v141 = vld [vmem:[#allocation5 + $0xc] sm:$0xf]
    %v142 = vld [vmem:[#allocation5 + $0x10] sm:$0xf]
    %v143 = vld [vmem:[#allocation5 + $0x14] sm:$0xf]
    %v144 = vld [vmem:[#allocation5 + $0x18] sm:$0xf]
    %v145 = vld [vmem:[#allocation5 + $0x1c] sm:$0xf]
    %v146 = vld [vmem:[#allocation5 + $0x20] sm:$0xf]
    %v147 = vld [vmem:[#allocation5 + $0x24] sm:$0xf]
    %v148 = vld [vmem:[#allocation5 + $0x28] sm:$0xf]
    %v149 = vld [vmem:[#allocation5 + $0x2c] sm:$0xf]
    %v150 = vld [vmem:[#allocation5 + $0x30] sm:$0xf]
    %v151 = vld [vmem:[#allocation5 + $0x34] sm:$0xf]
    %v152 = vld [vmem:[#allocation5 + $0x38] sm:$0xf]
    %v153 = vld [vmem:[#allocation5 + $0x3c] sm:$0xf]
    %v154 = vld [vmem:[%s2] sm:$0x1]
    %v156 = vperm.slane %v154, 0
    %v174 = vunpack.c.l.b16 %v138
    %v175 = vunpack.c.l.b16 %v139
    %v176 = vunpack.c.l.b16 %v140
    %v177 = vunpack.c.l.b16 %v141
    %v178 = vunpack.c.l.b16 %v142
    %v179 = vunpack.c.l.b16 %v143
    %v180 = vunpack.c.l.b16 %v144
    %v181 = vunpack.c.l.b16 %v145
    %v182 = vunpack.c.l.b16 %v146
    %v183 = vunpack.c.l.b16 %v147
    %v184 = vunpack.c.l.b16 %v148
    %v185 = vunpack.c.l.b16 %v149
    %v186 = vunpack.c.l.b16 %v150
    %v187 = vunpack.c.l.b16 %v151
    %v188 = vunpack.c.l.b16 %v152
    %v189 = vunpack.c.l.b16 %v153
    %v190 = vpack.c.b16 %v175, %v174
    %v191 = vpack.c.b16 %v177, %v176
    %v192 = vpack.c.b16 %v179, %v178
    %v193 = vpack.c.b16 %v181, %v180
    %v194 = vpack.c.b16 %v183, %v182
    %v195 = vpack.c.b16 %v185, %v184
    %v196 = vpack.c.b16 %v187, %v186
    %v197 = vpack.c.b16 %v189, %v188
    %206 = vmatpush.bf16.msra.mxu0 %v197
    %207 = vmatpush.bf16.msra.mxu0 %v196
    %208 = vmatpush.bf16.msra.mxu0 %v195
    %209 = vmatpush.bf16.msra.mxu0 %v194
    %210 = vmatpush.bf16.msra.mxu0 %v193
    %211 = vmatpush.bf16.msra.mxu0 %v192
    %212 = vmatpush.bf16.msra.mxu0 %v191
    %213 = vmatpush.bf16.msra.mxu0 %v190
    %214 = vmatmul.bf16.gmra.mxu0 %v122
    %v215 = vpop.f32.mrf.mxu0
    %v216 = vadd.f32 %v156, %v215
    %v217 = vpop.f32.mrf.mxu0
    %v218 = vadd.f32 %v156, %v217
    %219 = vmatmul.bf16.gmra.mxu0 %v123
    %v220 = vpop.f32.mrf.mxu0
    %v221 = vadd.f32 %v156, %v220
    %v222 = vpop.f32.mrf.mxu0
    %v223 = vadd.f32 %v156, %v222
    %224 = vmatmul.bf16.gmra.mxu0 %v124
    %v225 = vpop.f32.mrf.mxu0
    %v226 = vadd.f32 %v156, %v225
    %v227 = vpop.f32.mrf.mxu0
    %v228 = vadd.f32 %v156, %v227
    %229 = vmatmul.bf16.gmra.mxu0 %v125
    %v230 = vpop.f32.mrf.mxu0
    %v231 = vadd.f32 %v156, %v230
    %v232 = vpop.f32.mrf.mxu0
    %v233 = vadd.f32 %v156, %v232
    %234 = vmatmul.bf16.gmra.mxu0 %v126
    %v235 = vpop.f32.mrf.mxu0
    %v236 = vadd.f32 %v156, %v235
    %v237 = vpop.f32.mrf.mxu0
    %v238 = vadd.f32 %v156, %v237
    %239 = vmatmul.bf16.gmra.mxu0 %v127
    %v240 = vpop.f32.mrf.mxu0
    %v241 = vadd.f32 %v156, %v240
    %v242 = vpop.f32.mrf.mxu0
    %v243 = vadd.f32 %v156, %v242
    %244 = vmatmul.bf16.gmra.mxu0 %v128
    %v245 = vpop.f32.mrf.mxu0
    %v246 = vadd.f32 %v156, %v245
    %v247 = vpop.f32.mrf.mxu0
    %v248 = vadd.f32 %v156, %v247
    %249 = vmatmul.bf16.gmra.mxu0 %v129
    %v250 = vpop.f32.mrf.mxu0
    %v251 = vadd.f32 %v156, %v250
    %v252 = vpop.f32.mrf.mxu0
    %v253 = vadd.f32 %v156, %v252
    %254 = vmatmul.bf16.gmra.mxu0 %v130
    %v255 = vpop.f32.mrf.mxu0
    %v256 = vadd.f32 %v156, %v255
    %v257 = vpop.f32.mrf.mxu0
    %v258 = vadd.f32 %v156, %v257
    %259 = vmatmul.bf16.gmra.mxu0 %v131
    %v260 = vpop.f32.mrf.mxu0
    %v261 = vadd.f32 %v156, %v260
    %v262 = vpop.f32.mrf.mxu0
    %v263 = vadd.f32 %v156, %v262
    %264 = vmatmul.bf16.gmra.mxu0 %v132
    %v265 = vpop.f32.mrf.mxu0
    %v266 = vadd.f32 %v156, %v265
    %v267 = vpop.f32.mrf.mxu0
    %v268 = vadd.f32 %v156, %v267
    %269 = vmatmul.bf16.gmra.mxu0 %v133
    %v270 = vpop.f32.mrf.mxu0
    %v271 = vadd.f32 %v156, %v270
    %v272 = vpop.f32.mrf.mxu0
    %v273 = vadd.f32 %v156, %v272
    %274 = vmatmul.bf16.gmra.mxu0 %v134
    %v275 = vpop.f32.mrf.mxu0
    %v276 = vadd.f32 %v156, %v275
    %v277 = vpop.f32.mrf.mxu0
    %v278 = vadd.f32 %v156, %v277
    %279 = vmatmul.bf16.gmra.mxu0 %v135
    %v280 = vpop.f32.mrf.mxu0
    %v281 = vadd.f32 %v156, %v280
    %v282 = vpop.f32.mrf.mxu0
    %v283 = vadd.f32 %v156, %v282
    %284 = vmatmul.bf16.gmra.mxu0 %v136
    %v285 = vpop.f32.mrf.mxu0
    %v286 = vadd.f32 %v156, %v285
    %v287 = vpop.f32.mrf.mxu0
    %v288 = vadd.f32 %v156, %v287
    %289 = vmatmul.bf16.gmra.mxu0 %v137
    %v290 = vpop.f32.mrf.mxu0
    %v291 = vadd.f32 %v156, %v290
    %v292 = vpop.f32.mrf.mxu0
    %v293 = vadd.f32 %v156, %v292
    %294 = vdwg.mxu0
    %v295 = vpack.c.bf16 %v216, %v216
    %v296 = vpack.c.bf16 %v218, %v218
    %v297 = vpack.c.bf16 %v221, %v221
    %v298 = vpack.c.bf16 %v223, %v223
    %v299 = vpack.c.bf16 %v226, %v226
    %v300 = vpack.c.bf16 %v228, %v228
    %v301 = vpack.c.bf16 %v231, %v231
    %v302 = vpack.c.bf16 %v233, %v233
    %v303 = vpack.c.bf16 %v236, %v236
    %v304 = vpack.c.bf16 %v238, %v238
    %v305 = vpack.c.bf16 %v241, %v241
    %v306 = vpack.c.bf16 %v243, %v243
    %v307 = vpack.c.bf16 %v246, %v246
    %v308 = vpack.c.bf16 %v248, %v248
    %v309 = vpack.c.bf16 %v251, %v251
    %v310 = vpack.c.bf16 %v253, %v253
    %v311 = vpack.c.bf16 %v256, %v256
    %v312 = vpack.c.bf16 %v258, %v258
    %v313 = vpack.c.bf16 %v261, %v261
    %v314 = vpack.c.bf16 %v263, %v263
    %v315 = vpack.c.bf16 %v266, %v266
    %v316 = vpack.c.bf16 %v268, %v268
    %v317 = vpack.c.bf16 %v271, %v271
    %v318 = vpack.c.bf16 %v273, %v273
    %v319 = vpack.c.bf16 %v276, %v276
    %v320 = vpack.c.bf16 %v278, %v278
    %v321 = vpack.c.bf16 %v281, %v281
    %v322 = vpack.c.bf16 %v283, %v283
    %v323 = vpack.c.bf16 %v286, %v286
    %v324 = vpack.c.bf16 %v288, %v288
    %v325 = vpack.c.bf16 %v291, %v291
    %v326 = vpack.c.bf16 %v293, %v293
    %v327 = vunpack.c.l.bf16 %v295
    %v328 = vunpack.c.l.bf16 %v296
    %v329 = vunpack.c.l.bf16 %v297
    %v330 = vunpack.c.l.bf16 %v298
    %v331 = vunpack.c.l.bf16 %v299
    %v332 = vunpack.c.l.bf16 %v300
    %v333 = vunpack.c.l.bf16 %v301
    %v334 = vunpack.c.l.bf16 %v302
    %v335 = vunpack.c.l.bf16 %v303
    %v336 = vunpack.c.l.bf16 %v304
    %v337 = vunpack.c.l.bf16 %v305
    %v338 = vunpack.c.l.bf16 %v306
    %v339 = vunpack.c.l.bf16 %v307
    %v340 = vunpack.c.l.bf16 %v308
    %v341 = vunpack.c.l.bf16 %v309
    %v342 = vunpack.c.l.bf16 %v310
    %v343 = vunpack.c.l.bf16 %v311
    %v344 = vunpack.c.l.bf16 %v312
    %v345 = vunpack.c.l.bf16 %v313
    %v346 = vunpack.c.l.bf16 %v314
    %v347 = vunpack.c.l.bf16 %v315
    %v348 = vunpack.c.l.bf16 %v316
    %v349 = vunpack.c.l.bf16 %v317
    %v350 = vunpack.c.l.bf16 %v318
    %v351 = vunpack.c.l.bf16 %v319
    %v352 = vunpack.c.l.bf16 %v320
    %v353 = vunpack.c.l.bf16 %v321
    %v354 = vunpack.c.l.bf16 %v322
    %v355 = vunpack.c.l.bf16 %v323
    %v356 = vunpack.c.l.bf16 %v324
    %v357 = vunpack.c.l.bf16 %v325
    %v358 = vunpack.c.l.bf16 %v326
    %v359 = vmax.f32 %v327, 0.0
    %v360 = vmax.f32 %v328, 0.0
    %v361 = vmax.f32 %v329, 0.0
    %v362 = vmax.f32 %v330, 0.0
    %v363 = vmax.f32 %v331, 0.0
    %v364 = vmax.f32 %v332, 0.0
    %v365 = vmax.f32 %v333, 0.0
    %v366 = vmax.f32 %v334, 0.0
    %v367 = vmax.f32 %v335, 0.0
    %v368 = vmax.f32 %v336, 0.0
    %v369 = vmax.f32 %v337, 0.0
    %v370 = vmax.f32 %v338, 0.0
    %v371 = vmax.f32 %v339, 0.0
    %v372 = vmax.f32 %v340, 0.0
    %v373 = vmax.f32 %v341, 0.0
    %v374 = vmax.f32 %v342, 0.0
    %v375 = vmax.f32 %v343, 0.0
    %v376 = vmax.f32 %v344, 0.0
    %v377 = vmax.f32 %v345, 0.0
    %v378 = vmax.f32 %v346, 0.0
    %v379 = vmax.f32 %v347, 0.0
    %v380 = vmax.f32 %v348, 0.0
    %v381 = vmax.f32 %v349, 0.0
    %v382 = vmax.f32 %v350, 0.0
    %v383 = vmax.f32 %v351, 0.0
    %v384 = vmax.f32 %v352, 0.0
    %v385 = vmax.f32 %v353, 0.0
    %v386 = vmax.f32 %v354, 0.0
    %v387 = vmax.f32 %v355, 0.0
    %v388 = vmax.f32 %v356, 0.0
    %v389 = vmax.f32 %v357, 0.0
    %v390 = vmax.f32 %v358, 0.0
    %v391 = vpack.c.bf16 %v360, %v359
    %v392 = vpack.c.bf16 %v362, %v361
    %v393 = vpack.c.bf16 %v364, %v363
    %v394 = vpack.c.bf16 %v366, %v365
    %v395 = vpack.c.bf16 %v368, %v367
    %v396 = vpack.c.bf16 %v370, %v369
    %v397 = vpack.c.bf16 %v372, %v371
    %v398 = vpack.c.bf16 %v374, %v373
    %v399 = vpack.c.bf16 %v376, %v375
    %v400 = vpack.c.bf16 %v378, %v377
    %v401 = vpack.c.bf16 %v380, %v379
    %v402 = vpack.c.bf16 %v382, %v381
    %v403 = vpack.c.bf16 %v384, %v383
    %v404 = vpack.c.bf16 %v386, %v385
    %v405 = vpack.c.bf16 %v388, %v387
    %v406 = vpack.c.bf16 %v390, %v389
    %v407 = vld [vmem:[#allocation7] sm:$0xf]
    %v408 = vld [vmem:[#allocation7 + $0x4] sm:$0xf]
    %v409 = vld [vmem:[#allocation7 + $0x8] sm:$0xf]
    %v410 = vld [vmem:[#allocation7 + $0xc] sm:$0xf]
    %v411 = vld [vmem:[#allocation7 + $0x10] sm:$0xf]
    %v412 = vld [vmem:[#allocation7 + $0x14] sm:$0xf]
    %v413 = vld [vmem:[#allocation7 + $0x18] sm:$0xf]
    %v414 = vld [vmem:[#allocation7 + $0x1c] sm:$0xf]
    %v415 = vld [vmem:[#allocation7 + $0x20] sm:$0xf]
    %v416 = vld [vmem:[#allocation7 + $0x24] sm:$0xf]
    %v417 = vld [vmem:[#allocation7 + $0x28] sm:$0xf]
    %v418 = vld [vmem:[#allocation7 + $0x2c] sm:$0xf]
    %v419 = vld [vmem:[#allocation7 + $0x30] sm:$0xf]
    %v420 = vld [vmem:[#allocation7 + $0x34] sm:$0xf]
    %v421 = vld [vmem:[#allocation7 + $0x38] sm:$0xf]
    %v422 = vld [vmem:[#allocation7 + $0x3c] sm:$0xf]
    %v423 = vld [vmem:[%s4] sm:$0x1]
    %v425 = vperm.slane %v423, 0
    %v443 = vunpack.c.l.b16 %v407
    %v444 = vunpack.c.l.b16 %v408
    %v445 = vunpack.c.l.b16 %v409
    %v446 = vunpack.c.l.b16 %v410
    %v447 = vunpack.c.l.b16 %v411
    %v448 = vunpack.c.l.b16 %v412
    %v449 = vunpack.c.l.b16 %v413
    %v450 = vunpack.c.l.b16 %v414
    %v451 = vunpack.c.l.b16 %v415
    %v452 = vunpack.c.l.b16 %v416
    %v453 = vunpack.c.l.b16 %v417
    %v454 = vunpack.c.l.b16 %v418
    %v455 = vunpack.c.l.b16 %v419
    %v456 = vunpack.c.l.b16 %v420
    %v457 = vunpack.c.l.b16 %v421
    %v458 = vunpack.c.l.b16 %v422
    %v459 = vpack.c.b16 %v444, %v443
    %v460 = vpack.c.b16 %v446, %v445
    %v461 = vpack.c.b16 %v448, %v447
    %v462 = vpack.c.b16 %v450, %v449
    %v463 = vpack.c.b16 %v452, %v451
    %v464 = vpack.c.b16 %v454, %v453
    %v465 = vpack.c.b16 %v456, %v455
    %v466 = vpack.c.b16 %v458, %v457
    %475 = vmatpush.bf16.msra.mxu0 %v466
    %476 = vmatpush.bf16.msra.mxu0 %v465
    %477 = vmatpush.bf16.msra.mxu0 %v464
    %478 = vmatpush.bf16.msra.mxu0 %v463
    %479 = vmatpush.bf16.msra.mxu0 %v462
    %480 = vmatpush.bf16.msra.mxu0 %v461
    %481 = vmatpush.bf16.msra.mxu0 %v460
    %482 = vmatpush.bf16.msra.mxu0 %v459
    %483 = vmatmul.bf16.gmra.mxu0 %v391
    %v484 = vpop.f32.mrf.mxu0
    %v485 = vadd.f32 %v425, %v484
    %v486 = vpop.f32.mrf.mxu0
    %v487 = vadd.f32 %v425, %v486
    %488 = vmatmul.bf16.gmra.mxu0 %v392
    %v489 = vpop.f32.mrf.mxu0
    %v490 = vadd.f32 %v425, %v489
    %v491 = vpop.f32.mrf.mxu0
    %v492 = vadd.f32 %v425, %v491
    %493 = vmatmul.bf16.gmra.mxu0 %v393
    %v494 = vpop.f32.mrf.mxu0
    %v495 = vadd.f32 %v425, %v494
    %v496 = vpop.f32.mrf.mxu0
    %v497 = vadd.f32 %v425, %v496
    %498 = vmatmul.bf16.gmra.mxu0 %v394
    %v499 = vpop.f32.mrf.mxu0
    %v500 = vadd.f32 %v425, %v499
    %v501 = vpop.f32.mrf.mxu0
    %v502 = vadd.f32 %v425, %v501
    %503 = vmatmul.bf16.gmra.mxu0 %v395
    %v504 = vpop.f32.mrf.mxu0
    %v505 = vadd.f32 %v425, %v504
    %v506 = vpop.f32.mrf.mxu0
    %v507 = vadd.f32 %v425, %v506
    %508 = vmatmul.bf16.gmra.mxu0 %v396
    %v509 = vpop.f32.mrf.mxu0
    %v510 = vadd.f32 %v425, %v509
    %v511 = vpop.f32.mrf.mxu0
    %v512 = vadd.f32 %v425, %v511
    %513 = vmatmul.bf16.gmra.mxu0 %v397
    %v514 = vpop.f32.mrf.mxu0
    %v515 = vadd.f32 %v425, %v514
    %v516 = vpop.f32.mrf.mxu0
    %v517 = vadd.f32 %v425, %v516
    %518 = vmatmul.bf16.gmra.mxu0 %v398
    %v519 = vpop.f32.mrf.mxu0
    %v520 = vadd.f32 %v425, %v519
    %v521 = vpop.f32.mrf.mxu0
    %v522 = vadd.f32 %v425, %v521
    %523 = vmatmul.bf16.gmra.mxu0 %v399
    %v524 = vpop.f32.mrf.mxu0
    %v525 = vadd.f32 %v425, %v524
    %v526 = vpop.f32.mrf.mxu0
    %v527 = vadd.f32 %v425, %v526
    %528 = vmatmul.bf16.gmra.mxu0 %v400
    %v529 = vpop.f32.mrf.mxu0
    %v530 = vadd.f32 %v425, %v529
    %v531 = vpop.f32.mrf.mxu0
    %v532 = vadd.f32 %v425, %v531
    %533 = vmatmul.bf16.gmra.mxu0 %v401
    %v534 = vpop.f32.mrf.mxu0
    %v535 = vadd.f32 %v425, %v534
    %v536 = vpop.f32.mrf.mxu0
    %v537 = vadd.f32 %v425, %v536
    %538 = vmatmul.bf16.gmra.mxu0 %v402
    %v539 = vpop.f32.mrf.mxu0
    %v540 = vadd.f32 %v425, %v539
    %v541 = vpop.f32.mrf.mxu0
    %v542 = vadd.f32 %v425, %v541
    %543 = vmatmul.bf16.gmra.mxu0 %v403
    %v544 = vpop.f32.mrf.mxu0
    %v545 = vadd.f32 %v425, %v544
    %v546 = vpop.f32.mrf.mxu0
    %v547 = vadd.f32 %v425, %v546
    %548 = vmatmul.bf16.gmra.mxu0 %v404
    %v549 = vpop.f32.mrf.mxu0
    %v550 = vadd.f32 %v425, %v549
    %v551 = vpop.f32.mrf.mxu0
    %v552 = vadd.f32 %v425, %v551
    %553 = vmatmul.bf16.gmra.mxu0 %v405
    %v554 = vpop.f32.mrf.mxu0
    %v555 = vadd.f32 %v425, %v554
    %v556 = vpop.f32.mrf.mxu0
    %v557 = vadd.f32 %v425, %v556
    %558 = vmatmul.bf16.gmra.mxu0 %v406
    %v559 = vpop.f32.mrf.mxu0
    %v560 = vadd.f32 %v425, %v559
    %v561 = vpop.f32.mrf.mxu0
    %v562 = vadd.f32 %v425, %v561
    %563 = vdwg.mxu0
    %v564 = vpack.c.bf16 %v485, %v485
    %v565 = vpack.c.bf16 %v487, %v487
    %v566 = vpack.c.bf16 %v490, %v490
    %v567 = vpack.c.bf16 %v492, %v492
    %v568 = vpack.c.bf16 %v495, %v495
    %v569 = vpack.c.bf16 %v497, %v497
    %v570 = vpack.c.bf16 %v500, %v500
    %v571 = vpack.c.bf16 %v502, %v502
    %v572 = vpack.c.bf16 %v505, %v505
    %v573 = vpack.c.bf16 %v507, %v507
    %v574 = vpack.c.bf16 %v510, %v510
    %v575 = vpack.c.bf16 %v512, %v512
    %v576 = vpack.c.bf16 %v515, %v515
    %v577 = vpack.c.bf16 %v517, %v517
    %v578 = vpack.c.bf16 %v520, %v520
    %v579 = vpack.c.bf16 %v522, %v522
    %v580 = vpack.c.bf16 %v525, %v525
    %v581 = vpack.c.bf16 %v527, %v527
    %v582 = vpack.c.bf16 %v530, %v530
    %v583 = vpack.c.bf16 %v532, %v532
    %v584 = vpack.c.bf16 %v535, %v535
    %v585 = vpack.c.bf16 %v537, %v537
    %v586 = vpack.c.bf16 %v540, %v540
    %v587 = vpack.c.bf16 %v542, %v542
    %v588 = vpack.c.bf16 %v545, %v545
    %v589 = vpack.c.bf16 %v547, %v547
    %v590 = vpack.c.bf16 %v550, %v550
    %v591 = vpack.c.bf16 %v552, %v552
    %v592 = vpack.c.bf16 %v555, %v555
    %v593 = vpack.c.bf16 %v557, %v557
    %v594 = vpack.c.bf16 %v560, %v560
    %v595 = vpack.c.bf16 %v562, %v562
    %v596 = vunpack.c.l.bf16 %v564
    %v597 = vunpack.c.l.bf16 %v565
    %v598 = vunpack.c.l.bf16 %v566
    %v599 = vunpack.c.l.bf16 %v567
    %v600 = vunpack.c.l.bf16 %v568
    %v601 = vunpack.c.l.bf16 %v569
    %v602 = vunpack.c.l.bf16 %v570
    %v603 = vunpack.c.l.bf16 %v571
    %v604 = vunpack.c.l.bf16 %v572
    %v605 = vunpack.c.l.bf16 %v573
    %v606 = vunpack.c.l.bf16 %v574
    %v607 = vunpack.c.l.bf16 %v575
    %v608 = vunpack.c.l.bf16 %v576
    %v609 = vunpack.c.l.bf16 %v577
    %v610 = vunpack.c.l.bf16 %v578
    %v611 = vunpack.c.l.bf16 %v579
    %v612 = vunpack.c.l.bf16 %v580
    %v613 = vunpack.c.l.bf16 %v581
    %v614 = vunpack.c.l.bf16 %v582
    %v615 = vunpack.c.l.bf16 %v583
    %v616 = vunpack.c.l.bf16 %v584
    %v617 = vunpack.c.l.bf16 %v585
    %v618 = vunpack.c.l.bf16 %v586
    %v619 = vunpack.c.l.bf16 %v587
    %v620 = vunpack.c.l.bf16 %v588
    %v621 = vunpack.c.l.bf16 %v589
    %v622 = vunpack.c.l.bf16 %v590
    %v623 = vunpack.c.l.bf16 %v591
    %v624 = vunpack.c.l.bf16 %v592
    %v625 = vunpack.c.l.bf16 %v593
    %v626 = vunpack.c.l.bf16 %v594
    %v627 = vunpack.c.l.bf16 %v595
    %v628 = vmax.f32 %v596, 0.0
    %v629 = vmax.f32 %v597, 0.0
    %v630 = vmax.f32 %v598, 0.0
    %v631 = vmax.f32 %v599, 0.0
    %v632 = vmax.f32 %v600, 0.0
    %v633 = vmax.f32 %v601, 0.0
    %v634 = vmax.f32 %v602, 0.0
    %v635 = vmax.f32 %v603, 0.0
    %v636 = vmax.f32 %v604, 0.0
    %v637 = vmax.f32 %v605, 0.0
    %v638 = vmax.f32 %v606, 0.0
    %v639 = vmax.f32 %v607, 0.0
    %v640 = vmax.f32 %v608, 0.0
    %v641 = vmax.f32 %v609, 0.0
    %v642 = vmax.f32 %v610, 0.0
    %v643 = vmax.f32 %v611, 0.0
    %v644 = vmax.f32 %v612, 0.0
    %v645 = vmax.f32 %v613, 0.0
    %v646 = vmax.f32 %v614, 0.0
    %v647 = vmax.f32 %v615, 0.0
    %v648 = vmax.f32 %v616, 0.0
    %v649 = vmax.f32 %v617, 0.0
    %v650 = vmax.f32 %v618, 0.0
    %v651 = vmax.f32 %v619, 0.0
    %v652 = vmax.f32 %v620, 0.0
    %v653 = vmax.f32 %v621, 0.0
    %v654 = vmax.f32 %v622, 0.0
    %v655 = vmax.f32 %v623, 0.0
    %v656 = vmax.f32 %v624, 0.0
    %v657 = vmax.f32 %v625, 0.0
    %v658 = vmax.f32 %v626, 0.0
    %v659 = vmax.f32 %v627, 0.0
    %v660 = vpack.c.bf16 %v629, %v628
    %v661 = vpack.c.bf16 %v631, %v630
    %v662 = vpack.c.bf16 %v633, %v632
    %v663 = vpack.c.bf16 %v635, %v634
    %v664 = vpack.c.bf16 %v637, %v636
    %v665 = vpack.c.bf16 %v639, %v638
    %v666 = vpack.c.bf16 %v641, %v640
    %v667 = vpack.c.bf16 %v643, %v642
    %v668 = vpack.c.bf16 %v645, %v644
    %v669 = vpack.c.bf16 %v647, %v646
    %v670 = vpack.c.bf16 %v649, %v648
    %v671 = vpack.c.bf16 %v651, %v650
    %v672 = vpack.c.bf16 %v653, %v652
    %v673 = vpack.c.bf16 %v655, %v654
    %v674 = vpack.c.bf16 %v657, %v656
    %v675 = vpack.c.bf16 %v659, %v658
    %v676 = vld [vmem:[#allocation8] sm:$0xf]
    %v677 = vld [vmem:[#allocation8 + $0x4] sm:$0xf]
    %v678 = vld [vmem:[#allocation8 + $0x8] sm:$0xf]
    %v679 = vld [vmem:[#allocation8 + $0xc] sm:$0xf]
    %v680 = vld [vmem:[#allocation8 + $0x10] sm:$0xf]
    %v681 = vld [vmem:[#allocation8 + $0x14] sm:$0xf]
    %v682 = vld [vmem:[#allocation8 + $0x18] sm:$0xf]
    %v683 = vld [vmem:[#allocation8 + $0x1c] sm:$0xf]
    %v684 = vld [vmem:[#allocation8 + $0x20] sm:$0xf]
    %v685 = vld [vmem:[#allocation8 + $0x24] sm:$0xf]
    %v686 = vld [vmem:[#allocation8 + $0x28] sm:$0xf]
    %v687 = vld [vmem:[#allocation8 + $0x2c] sm:$0xf]
    %v688 = vld [vmem:[#allocation8 + $0x30] sm:$0xf]
    %v689 = vld [vmem:[#allocation8 + $0x34] sm:$0xf]
    %v690 = vld [vmem:[#allocation8 + $0x38] sm:$0xf]
    %v691 = vld [vmem:[#allocation8 + $0x3c] sm:$0xf]
    %v692 = vld [vmem:[%s6] sm:$0x1]
    %v694 = vperm.slane %v692, 0
    %v712 = vunpack.c.l.b16 %v676
    %v713 = vunpack.c.l.b16 %v677
    %v714 = vunpack.c.l.b16 %v678
    %v715 = vunpack.c.l.b16 %v679
    %v716 = vunpack.c.l.b16 %v680
    %v717 = vunpack.c.l.b16 %v681
    %v718 = vunpack.c.l.b16 %v682
    %v719 = vunpack.c.l.b16 %v683
    %v720 = vunpack.c.l.b16 %v684
    %v721 = vunpack.c.l.b16 %v685
    %v722 = vunpack.c.l.b16 %v686
    %v723 = vunpack.c.l.b16 %v687
    %v724 = vunpack.c.l.b16 %v688
    %v725 = vunpack.c.l.b16 %v689
    %v726 = vunpack.c.l.b16 %v690
    %v727 = vunpack.c.l.b16 %v691
    %v728 = vpack.c.b16 %v713, %v712
    %v729 = vpack.c.b16 %v715, %v714
    %v730 = vpack.c.b16 %v717, %v716
    %v731 = vpack.c.b16 %v719, %v718
    %v732 = vpack.c.b16 %v721, %v720
    %v733 = vpack.c.b16 %v723, %v722
    %v734 = vpack.c.b16 %v725, %v724
    %v735 = vpack.c.b16 %v727, %v726
    %744 = vmatpush.bf16.msra.mxu0 %v735
    %745 = vmatpush.bf16.msra.mxu0 %v734
    %746 = vmatpush.bf16.msra.mxu0 %v733
    %747 = vmatpush.bf16.msra.mxu0 %v732
    %748 = vmatpush.bf16.msra.mxu0 %v731
    %749 = vmatpush.bf16.msra.mxu0 %v730
    %750 = vmatpush.bf16.msra.mxu0 %v729
    %751 = vmatpush.bf16.msra.mxu0 %v728
    %752 = vmatmul.bf16.gmra.mxu0 %v660
    %v753 = vpop.f32.mrf.mxu0
    %v754 = vadd.f32 %v694, %v753
    %v755 = vpop.f32.mrf.mxu0
    %v756 = vadd.f32 %v694, %v755
    %757 = vmatmul.bf16.gmra.mxu0 %v661
    %v758 = vpop.f32.mrf.mxu0
    %v759 = vadd.f32 %v694, %v758
    %v760 = vpop.f32.mrf.mxu0
    %v761 = vadd.f32 %v694, %v760
    %762 = vmatmul.bf16.gmra.mxu0 %v662
    %v763 = vpop.f32.mrf.mxu0
    %v764 = vadd.f32 %v694, %v763
    %v765 = vpop.f32.mrf.mxu0
    %v766 = vadd.f32 %v694, %v765
    %767 = vmatmul.bf16.gmra.mxu0 %v663
    %v768 = vpop.f32.mrf.mxu0
    %v769 = vadd.f32 %v694, %v768
    %v770 = vpop.f32.mrf.mxu0
    %v771 = vadd.f32 %v694, %v770
    %772 = vmatmul.bf16.gmra.mxu0 %v664
    %v773 = vpop.f32.mrf.mxu0
    %v774 = vadd.f32 %v694, %v773
    %v775 = vpop.f32.mrf.mxu0
    %v776 = vadd.f32 %v694, %v775
    %777 = vmatmul.bf16.gmra.mxu0 %v665
    %v778 = vpop.f32.mrf.mxu0
    %v779 = vadd.f32 %v694, %v778
    %v780 = vpop.f32.mrf.mxu0
    %v781 = vadd.f32 %v694, %v780
    %782 = vmatmul.bf16.gmra.mxu0 %v666
    %v783 = vpop.f32.mrf.mxu0
    %v784 = vadd.f32 %v694, %v783
    %v785 = vpop.f32.mrf.mxu0
    %v786 = vadd.f32 %v694, %v785
    %787 = vmatmul.bf16.gmra.mxu0 %v667
    %v788 = vpop.f32.mrf.mxu0
    %v789 = vadd.f32 %v694, %v788
    %v790 = vpop.f32.mrf.mxu0
    %v791 = vadd.f32 %v694, %v790
    %792 = vmatmul.bf16.gmra.mxu0 %v668
    %v793 = vpop.f32.mrf.mxu0
    %v794 = vadd.f32 %v694, %v793
    %v795 = vpop.f32.mrf.mxu0
    %v796 = vadd.f32 %v694, %v795
    %797 = vmatmul.bf16.gmra.mxu0 %v669
    %v798 = vpop.f32.mrf.mxu0
    %v799 = vadd.f32 %v694, %v798
    %v800 = vpop.f32.mrf.mxu0
    %v801 = vadd.f32 %v694, %v800
    %802 = vmatmul.bf16.gmra.mxu0 %v670
    %v803 = vpop.f32.mrf.mxu0
    %v804 = vadd.f32 %v694, %v803
    %v805 = vpop.f32.mrf.mxu0
    %v806 = vadd.f32 %v694, %v805
    %807 = vmatmul.bf16.gmra.mxu0 %v671
    %v808 = vpop.f32.mrf.mxu0
    %v809 = vadd.f32 %v694, %v808
    %v810 = vpop.f32.mrf.mxu0
    %v811 = vadd.f32 %v694, %v810
    %812 = vmatmul.bf16.gmra.mxu0 %v672
    %v813 = vpop.f32.mrf.mxu0
    %v814 = vadd.f32 %v694, %v813
    %v815 = vpop.f32.mrf.mxu0
    %v816 = vadd.f32 %v694, %v815
    %817 = vmatmul.bf16.gmra.mxu0 %v673
    %v818 = vpop.f32.mrf.mxu0
    %v819 = vadd.f32 %v694, %v818
    %v820 = vpop.f32.mrf.mxu0
    %v821 = vadd.f32 %v694, %v820
    %822 = vmatmul.bf16.gmra.mxu0 %v674
    %v823 = vpop.f32.mrf.mxu0
    %v824 = vadd.f32 %v694, %v823
    %v825 = vpop.f32.mrf.mxu0
    %v826 = vadd.f32 %v694, %v825
    %827 = vmatmul.bf16.gmra.mxu0 %v675
    %v828 = vpop.f32.mrf.mxu0
    %v829 = vadd.f32 %v694, %v828
    %v830 = vpop.f32.mrf.mxu0
    %v831 = vadd.f32 %v694, %v830
    %832 = vdwg.mxu0
    %833 = vmax.xlane.f32.xlu0 %v754
    %v834 = vpop.xlane.xlu0 %833
    %835 = vmax.xlane.f32.xlu0 %v756
    %v836 = vpop.xlane.xlu0 %835
    %837 = vmax.xlane.f32.xlu0 %v759
    %v838 = vpop.xlane.xlu0 %837
    %839 = vmax.xlane.f32.xlu0 %v761
    %v840 = vpop.xlane.xlu0 %839
    %841 = vmax.xlane.f32.xlu0 %v764
    %v842 = vpop.xlane.xlu0 %841
    %843 = vmax.xlane.f32.xlu0 %v766
    %v844 = vpop.xlane.xlu0 %843
    %845 = vmax.xlane.f32.xlu0 %v769
    %v846 = vpop.xlane.xlu0 %845
    %847 = vmax.xlane.f32.xlu0 %v771
    %v848 = vpop.xlane.xlu0 %847
    %849 = vmax.xlane.f32.xlu0 %v774
    %v850 = vpop.xlane.xlu0 %849
    %851 = vmax.xlane.f32.xlu0 %v776
    %v852 = vpop.xlane.xlu0 %851
    %853 = vmax.xlane.f32.xlu0 %v779
    %v854 = vpop.xlane.xlu0 %853
    %855 = vmax.xlane.f32.xlu0 %v781
    %v856 = vpop.xlane.xlu0 %855
    %857 = vmax.xlane.f32.xlu0 %v784
    %v858 = vpop.xlane.xlu0 %857
    %859 = vmax.xlane.f32.xlu0 %v786
    %v860 = vpop.xlane.xlu0 %859
    %861 = vmax.xlane.f32.xlu0 %v789
    %v862 = vpop.xlane.xlu0 %861
    %863 = vmax.xlane.f32.xlu0 %v791
    %v864 = vpop.xlane.xlu0 %863
    %865 = vmax.xlane.f32.xlu0 %v794
    %v866 = vpop.xlane.xlu0 %865
    %867 = vmax.xlane.f32.xlu0 %v796
    %v868 = vpop.xlane.xlu0 %867
    %869 = vmax.xlane.f32.xlu0 %v799
    %v870 = vpop.xlane.xlu0 %869
    %871 = vmax.xlane.f32.xlu0 %v801
    %v872 = vpop.xlane.xlu0 %871
    %873 = vmax.xlane.f32.xlu0 %v804
    %v874 = vpop.xlane.xlu0 %873
    %875 = vmax.xlane.f32.xlu0 %v806
    %v876 = vpop.xlane.xlu0 %875
    %877 = vmax.xlane.f32.xlu0 %v809
    %v878 = vpop.xlane.xlu0 %877
    %879 = vmax.xlane.f32.xlu0 %v811
    %v880 = vpop.xlane.xlu0 %879
    %881 = vmax.xlane.f32.xlu0 %v814
    %v882 = vpop.xlane.xlu0 %881
    %883 = vmax.xlane.f32.xlu0 %v816
    %v884 = vpop.xlane.xlu0 %883
    %885 = vmax.xlane.f32.xlu0 %v819
    %v886 = vpop.xlane.xlu0 %885
    %887 = vmax.xlane.f32.xlu0 %v821
    %v888 = vpop.xlane.xlu0 %887
    %889 = vmax.xlane.f32.xlu0 %v824
    %v890 = vpop.xlane.xlu0 %889
    %891 = vmax.xlane.f32.xlu0 %v826
    %v892 = vpop.xlane.xlu0 %891
    %893 = vmax.xlane.f32.xlu0 %v829
    %v894 = vpop.xlane.xlu0 %893
    %895 = vmax.xlane.f32.xlu0 %v831
    %v896 = vpop.xlane.xlu0 %895
    %v897 = vsub.f32 %v754, %v834
    %v898 = vsub.f32 %v756, %v836
    %v899 = vsub.f32 %v759, %v838
    %v900 = vsub.f32 %v761, %v840
    %v901 = vsub.f32 %v764, %v842
    %v902 = vsub.f32 %v766, %v844
    %v903 = vsub.f32 %v769, %v846
    %v904 = vsub.f32 %v771, %v848
    %v905 = vsub.f32 %v774, %v850
    %v906 = vsub.f32 %v776, %v852
    %v907 = vsub.f32 %v779, %v854
    %v908 = vsub.f32 %v781, %v856
    %v909 = vsub.f32 %v784, %v858
    %v910 = vsub.f32 %v786, %v860
    %v911 = vsub.f32 %v789, %v862
    %v912 = vsub.f32 %v791, %v864
    %v913 = vsub.f32 %v794, %v866
    %v914 = vsub.f32 %v796, %v868
    %v915 = vsub.f32 %v799, %v870
    %v916 = vsub.f32 %v801, %v872
    %v917 = vsub.f32 %v804, %v874
    %v918 = vsub.f32 %v806, %v876
    %v919 = vsub.f32 %v809, %v878
    %v920 = vsub.f32 %v811, %v880
    %v921 = vsub.f32 %v814, %v882
    %v922 = vsub.f32 %v816, %v884
    %v923 = vsub.f32 %v819, %v886
    %v924 = vsub.f32 %v821, %v888
    %v925 = vsub.f32 %v824, %v890
    %v926 = vsub.f32 %v826, %v892
    %v927 = vsub.f32 %v829, %v894
    %v928 = vsub.f32 %v831, %v896
    %v929 = vmul.f32 %v897, 1.442695
    %v930 = vpow.pop %v929
    %v931 = vmul.f32 %v898, 1.442695
    %v932 = vpow.pop %v931
    %v933 = vmul.f32 %v899, 1.442695
    %v934 = vpow.pop %v933
    %v935 = vmul.f32 %v900, 1.442695
    %v936 = vpow.pop %v935
    %v937 = vmul.f32 %v901, 1.442695
    %v938 = vpow.pop %v937
    %v939 = vmul.f32 %v902, 1.442695
    %v940 = vpow.pop %v939
    %v941 = vmul.f32 %v903, 1.442695
    %v942 = vpow.pop %v941
    %v943 = vmul.f32 %v904, 1.442695
    %v944 = vpow.pop %v943
    %v945 = vmul.f32 %v905, 1.442695
    %v946 = vpow.pop %v945
    %v947 = vmul.f32 %v906, 1.442695
    %v948 = vpow.pop %v947
    %v949 = vmul.f32 %v907, 1.442695
    %v950 = vpow.pop %v949
    %v951 = vmul.f32 %v908, 1.442695
    %v952 = vpow.pop %v951
    %v953 = vmul.f32 %v909, 1.442695
    %v954 = vpow.pop %v953
    %v955 = vmul.f32 %v910, 1.442695
    %v956 = vpow.pop %v955
    %v957 = vmul.f32 %v911, 1.442695
    %v958 = vpow.pop %v957
    %v959 = vmul.f32 %v912, 1.442695
    %v960 = vpow.pop %v959
    %v961 = vmul.f32 %v913, 1.442695
    %v962 = vpow.pop %v961
    %v963 = vmul.f32 %v914, 1.442695
    %v964 = vpow.pop %v963
    %v965 = vmul.f32 %v915, 1.442695
    %v966 = vpow.pop %v965
    %v967 = vmul.f32 %v916, 1.442695
    %v968 = vpow.pop %v967
    %v969 = vmul.f32 %v917, 1.442695
    %v970 = vpow.pop %v969
    %v971 = vmul.f32 %v918, 1.442695
    %v972 = vpow.pop %v971
    %v973 = vmul.f32 %v919, 1.442695
    %v974 = vpow.pop %v973
    %v975 = vmul.f32 %v920, 1.442695
    %v976 = vpow.pop %v975
    %v977 = vmul.f32 %v921, 1.442695
    %v978 = vpow.pop %v977
    %v979 = vmul.f32 %v922, 1.442695
    %v980 = vpow.pop %v979
    %v981 = vmul.f32 %v923, 1.442695
    %v982 = vpow.pop %v981
    %v983 = vmul.f32 %v924, 1.442695
    %v984 = vpow.pop %v983
    %v985 = vmul.f32 %v925, 1.442695
    %v986 = vpow.pop %v985
    %v987 = vmul.f32 %v926, 1.442695
    %v988 = vpow.pop %v987
    %v989 = vmul.f32 %v927, 1.442695
    %v990 = vpow.pop %v989
    %v991 = vmul.f32 %v928, 1.442695
    %v992 = vpow.pop %v991
    %993 = vadd.xlane.f32.xlu0 %v930
    %v994 = vpop.xlane.xlu0 %993
    %995 = vadd.xlane.f32.xlu0 %v932
    %v996 = vpop.xlane.xlu0 %995
    %997 = vadd.xlane.f32.xlu0 %v934
    %v998 = vpop.xlane.xlu0 %997
    %999 = vadd.xlane.f32.xlu0 %v936
    %v1000 = vpop.xlane.xlu0 %999
    %1001 = vadd.xlane.f32.xlu0 %v938
    %v1002 = vpop.xlane.xlu0 %1001
    %1003 = vadd.xlane.f32.xlu0 %v940
    %v1004 = vpop.xlane.xlu0 %1003
    %1005 = vadd.xlane.f32.xlu0 %v942
    %v1006 = vpop.xlane.xlu0 %1005
    %1007 = vadd.xlane.f32.xlu0 %v944
    %v1008 = vpop.xlane.xlu0 %1007
    %1009 = vadd.xlane.f32.xlu0 %v946
    %v1010 = vpop.xlane.xlu0 %1009
    %1011 = vadd.xlane.f32.xlu0 %v948
    %v1012 = vpop.xlane.xlu0 %1011
    %1013 = vadd.xlane.f32.xlu0 %v950
    %v1014 = vpop.xlane.xlu0 %1013
    %1015 = vadd.xlane.f32.xlu0 %v952
    %v1016 = vpop.xlane.xlu0 %1015
    %1017 = vadd.xlane.f32.xlu0 %v954
    %v1018 = vpop.xlane.xlu0 %1017
    %1019 = vadd.xlane.f32.xlu0 %v956
    %v1020 = vpop.xlane.xlu0 %1019
    %1021 = vadd.xlane.f32.xlu0 %v958
    %v1022 = vpop.xlane.xlu0 %1021
    %1023 = vadd.xlane.f32.xlu0 %v960
    %v1024 = vpop.xlane.xlu0 %1023
    %1025 = vadd.xlane.f32.xlu0 %v962
    %v1026 = vpop.xlane.xlu0 %1025
    %1027 = vadd.xlane.f32.xlu0 %v964
    %v1028 = vpop.xlane.xlu0 %1027
    %1029 = vadd.xlane.f32.xlu0 %v966
    %v1030 = vpop.xlane.xlu0 %1029
    %1031 = vadd.xlane.f32.xlu0 %v968
    %v1032 = vpop.xlane.xlu0 %1031
    %1033 = vadd.xlane.f32.xlu0 %v970
    %v1034 = vpop.xlane.xlu0 %1033
    %1035 = vadd.xlane.f32.xlu0 %v972
    %v1036 = vpop.xlane.xlu0 %1035
    %1037 = vadd.xlane.f32.xlu0 %v974
    %v1038 = vpop.xlane.xlu0 %1037
    %1039 = vadd.xlane.f32.xlu0 %v976
    %v1040 = vpop.xlane.xlu0 %1039
    %1041 = vadd.xlane.f32.xlu0 %v978
    %v1042 = vpop.xlane.xlu0 %1041
    %1043 = vadd.xlane.f32.xlu0 %v980
    %v1044 = vpop.xlane.xlu0 %1043
    %1045 = vadd.xlane.f32.xlu0 %v982
    %v1046 = vpop.xlane.xlu0 %1045
    %1047 = vadd.xlane.f32.xlu0 %v984
    %v1048 = vpop.xlane.xlu0 %1047
    %1049 = vadd.xlane.f32.xlu0 %v986
    %v1050 = vpop.xlane.xlu0 %1049
    %1051 = vadd.xlane.f32.xlu0 %v988
    %v1052 = vpop.xlane.xlu0 %1051
    %1053 = vadd.xlane.f32.xlu0 %v990
    %v1054 = vpop.xlane.xlu0 %1053
    %1055 = vadd.xlane.f32.xlu0 %v992
    %v1056 = vpop.xlane.xlu0 %1055
    %v1057 = vlog2.pop %v994
    %v1058 = vmul.f32 %v1057, 0.6931472
    %v1059 = vlog2.pop %v996
    %v1060 = vmul.f32 %v1059, 0.6931472
    %v1061 = vlog2.pop %v998
    %v1062 = vmul.f32 %v1061, 0.6931472
    %v1063 = vlog2.pop %v1000
    %v1064 = vmul.f32 %v1063, 0.6931472
    %v1065 = vlog2.pop %v1002
    %v1066 = vmul.f32 %v1065, 0.6931472
    %v1067 = vlog2.pop %v1004
    %v1068 = vmul.f32 %v1067, 0.6931472
    %v1069 = vlog2.pop %v1006
    %v1070 = vmul.f32 %v1069, 0.6931472
    %v1071 = vlog2.pop %v1008
    %v1072 = vmul.f32 %v1071, 0.6931472
    %v1073 = vlog2.pop %v1010
    %v1074 = vmul.f32 %v1073, 0.6931472
    %v1075 = vlog2.pop %v1012
    %v1076 = vmul.f32 %v1075, 0.6931472
    %v1077 = vlog2.pop %v1014
    %v1078 = vmul.f32 %v1077, 0.6931472
    %v1079 = vlog2.pop %v1016
    %v1080 = vmul.f32 %v1079, 0.6931472
    %v1081 = vlog2.pop %v1018
    %v1082 = vmul.f32 %v1081, 0.6931472
    %v1083 = vlog2.pop %v1020
    %v1084 = vmul.f32 %v1083, 0.6931472
    %v1085 = vlog2.pop %v1022
    %v1086 = vmul.f32 %v1085, 0.6931472
    %v1087 = vlog2.pop %v1024
    %v1088 = vmul.f32 %v1087, 0.6931472
    %v1089 = vlog2.pop %v1026
    %v1090 = vmul.f32 %v1089, 0.6931472
    %v1091 = vlog2.pop %v1028
    %v1092 = vmul.f32 %v1091, 0.6931472
    %v1093 = vlog2.pop %v1030
    %v1094 = vmul.f32 %v1093, 0.6931472
    %v1095 = vlog2.pop %v1032
    %v1096 = vmul.f32 %v1095, 0.6931472
    %v1097 = vlog2.pop %v1034
    %v1098 = vmul.f32 %v1097, 0.6931472
    %v1099 = vlog2.pop %v1036
    %v1100 = vmul.f32 %v1099, 0.6931472
    %v1101 = vlog2.pop %v1038
    %v1102 = vmul.f32 %v1101, 0.6931472
    %v1103 = vlog2.pop %v1040
    %v1104 = vmul.f32 %v1103, 0.6931472
    %v1105 = vlog2.pop %v1042
    %v1106 = vmul.f32 %v1105, 0.6931472
    %v1107 = vlog2.pop %v1044
    %v1108 = vmul.f32 %v1107, 0.6931472
    %v1109 = vlog2.pop %v1046
    %v1110 = vmul.f32 %v1109, 0.6931472
    %v1111 = vlog2.pop %v1048
    %v1112 = vmul.f32 %v1111, 0.6931472
    %v1113 = vlog2.pop %v1050
    %v1114 = vmul.f32 %v1113, 0.6931472
    %v1115 = vlog2.pop %v1052
    %v1116 = vmul.f32 %v1115, 0.6931472
    %v1117 = vlog2.pop %v1054
    %v1118 = vmul.f32 %v1117, 0.6931472
    %v1119 = vlog2.pop %v1056
    %v1120 = vmul.f32 %v1119, 0.6931472
    %v1121 = vsub.f32 %v897, %v1058
    %v1122 = vsub.f32 %v898, %v1060
    %v1123 = vsub.f32 %v899, %v1062
    %v1124 = vsub.f32 %v900, %v1064
    %v1125 = vsub.f32 %v901, %v1066
    %v1126 = vsub.f32 %v902, %v1068
    %v1127 = vsub.f32 %v903, %v1070
    %v1128 = vsub.f32 %v904, %v1072
    %v1129 = vsub.f32 %v905, %v1074
    %v1130 = vsub.f32 %v906, %v1076
    %v1131 = vsub.f32 %v907, %v1078
    %v1132 = vsub.f32 %v908, %v1080
    %v1133 = vsub.f32 %v909, %v1082
    %v1134 = vsub.f32 %v910, %v1084
    %v1135 = vsub.f32 %v911, %v1086
    %v1136 = vsub.f32 %v912, %v1088
    %v1137 = vsub.f32 %v913, %v1090
    %v1138 = vsub.f32 %v914, %v1092
    %v1139 = vsub.f32 %v915, %v1094
    %v1140 = vsub.f32 %v916, %v1096
    %v1141 = vsub.f32 %v917, %v1098
    %v1142 = vsub.f32 %v918, %v1100
    %v1143 = vsub.f32 %v919, %v1102
    %v1144 = vsub.f32 %v920, %v1104
    %v1145 = vsub.f32 %v921, %v1106
    %v1146 = vsub.f32 %v922, %v1108
    %v1147 = vsub.f32 %v923, %v1110
    %v1148 = vsub.f32 %v924, %v1112
    %v1149 = vsub.f32 %v925, %v1114
    %v1150 = vsub.f32 %v926, %v1116
    %v1151 = vsub.f32 %v927, %v1118
    %v1152 = vsub.f32 %v928, %v1120
    %1153 = vst [vmem:[#allocation10] sm:$0xff] %v1121
    %1154 = vst [vmem:[#allocation10 + $0x8] sm:$0xff] %v1122
    %1155 = vst [vmem:[#allocation10 + $0x10] sm:$0xff] %v1123
    %1156 = vst [vmem:[#allocation10 + $0x18] sm:$0xff] %v1124
    %1157 = vst [vmem:[#allocation10 + $0x20] sm:$0xff] %v1125
    %1158 = vst [vmem:[#allocation10 + $0x28] sm:$0xff] %v1126
    %1159 = vst [vmem:[#allocation10 + $0x30] sm:$0xff] %v1127
    %1160 = vst [vmem:[#allocation10 + $0x38] sm:$0xff] %v1128
    %1161 = vst [vmem:[#allocation10 + $0x40] sm:$0xff] %v1129
    %1162 = vst [vmem:[#allocation10 + $0x48] sm:$0xff] %v1130
    %1163 = vst [vmem:[#allocation10 + $0x50] sm:$0xff] %v1131
    %1164 = vst [vmem:[#allocation10 + $0x58] sm:$0xff] %v1132
    %1165 = vst [vmem:[#allocation10 + $0x60] sm:$0xff] %v1133
    %1166 = vst [vmem:[#allocation10 + $0x68] sm:$0xff] %v1134
    %1167 = vst [vmem:[#allocation10 + $0x70] sm:$0xff] %v1135
    %1168 = vst [vmem:[#allocation10 + $0x78] sm:$0xff] %v1136
    %1169 = vst [vmem:[#allocation10 + $0x80] sm:$0xff] %v1137
    %1170 = vst [vmem:[#allocation10 + $0x88] sm:$0xff] %v1138
    %1171 = vst [vmem:[#allocation10 + $0x90] sm:$0xff] %v1139
    %1172 = vst [vmem:[#allocation10 + $0x98] sm:$0xff] %v1140
    %1173 = vst [vmem:[#allocation10 + $0xa0] sm:$0xff] %v1141
    %1174 = vst [vmem:[#allocation10 + $0xa8] sm:$0xff] %v1142
    %1175 = vst [vmem:[#allocation10 + $0xb0] sm:$0xff] %v1143
    %1176 = vst [vmem:[#allocation10 + $0xb8] sm:$0xff] %v1144
    %1177 = vst [vmem:[#allocation10 + $0xc0] sm:$0xff] %v1145
    %1178 = vst [vmem:[#allocation10 + $0xc8] sm:$0xff] %v1146
    %1179 = vst [vmem:[#allocation10 + $0xd0] sm:$0xff] %v1147
    %1180 = vst [vmem:[#allocation10 + $0xd8] sm:$0xff] %v1148
    %1181 = vst [vmem:[#allocation10 + $0xe0] sm:$0xff] %v1149
    %1182 = vst [vmem:[#allocation10 + $0xe8] sm:$0xff] %v1150
    %1183 = vst [vmem:[#allocation10 + $0xf0] sm:$0xff] %v1151
    %1184 = vst [vmem:[#allocation10 + $0xf8] sm:$0xff] %v1152
    // Predicated region
    $region46: #{tpu_custom_call.1} parent=1 // pred_check
      _
    $region47: #{tpu_custom_call.1} parent=1 // pred_check_branch
      %1186 = sbr.rel (0) target = $region49
    $region48: #{tpu_custom_call.1} parent=1 // pred_region
      %1188 = vsyncadd [#allocation4], 0
      %s1189 = sshll.u32 [#allocation10], 4
      %s1190 = int_to_ptr.vmem [resolvable:$true] %s1189
      %s1191 = sshll.u32 %s7, 4
      %s1192 = int_to_ptr.hbm [resolvable:$true] %s1191
      %1197 = dma.vmem_to_hbm [thread:$0]  %s1190, 4096, %s1192, [#allocation4], 128, 128, 8
    $region49: #{tpu_custom_call.1} parent=1 // pred_fallthru
      _
    // Predicated region
    $region50: #{tpu_custom_call.1} parent=1 // pred_check
      _
    $region51: #{tpu_custom_call.1} parent=1 // pred_check_branch
      %1199 = sbr.rel (0) target = $region53
    $region52: #{tpu_custom_call.1} parent=1 // pred_region
      %1201 = dma.done [#allocation4], 4096
    $region53: #{tpu_custom_call.1} parent=1 // pred_fallthru
      _
    %1202 = vsyncpa [#allocation3], 1
    %1203 = vsyncpa [#allocation6], 1
    %1204 = vsyncpa [#allocation9], 1
    %1205 = vsyncpa [#allocation4], 1

</llo_original>
